<compile_context>
chip_gen: v7x
topology: tpu7x:2x2x1
jax: 0.10.0
libtpu: 0.0.40
codegen_flags: <defaults>
</compile_context>

<pallas_src>
import functools
import math

import jax
import jax.numpy as jnp
from jax.experimental import pallas as pl
from jax.experimental.pallas import tpu as pltpu


def _round_up(n, m):
    return ((n + m - 1) // m) * m


def _pad_to(a, shape):
    pads = [(0, t - s) for s, t in zip(a.shape, shape)]
    return jnp.pad(a, pads)


def gcn_dense_kernel(x_ref, adj_ref, w1_ref, b1_ref, w2_ref, b2_ref, out_ref,
                     *, reassociate_l1):
    """Fused 2-layer dense GCN forward for one graph of the batch.

    x_ref:   (1, Np, Fp)  bf16
    adj_ref: (1, Np, Np)  bf16
    w1_ref:  (Fp, Hp)     bf16
    b1_ref:  (1, Hp)      f32
    w2_ref:  (Hp, Hp)     bf16
    b2_ref:  (1, Hp)      f32
    out_ref: (1, Np, Hp)  f32
    """
    bf16 = jnp.bfloat16
    x = x_ref[0]      # [Np, Fp]
    adj = adj_ref[0]  # [Np, Np]
    w1 = w1_ref[...]
    w2 = w2_ref[...]

    # --- Layer 1: relu(adj @ x @ W1 + b1) -----------------------------------
    if reassociate_l1:
        # (adj @ x) @ W1 — the N*N contraction runs over F_in (< H).
        ax = jnp.dot(adj, x, preferred_element_type=jnp.float32)
        h = jnp.dot(ax.astype(bf16), w1, preferred_element_type=jnp.float32)
    else:
        # adj @ (x @ W1) — cheaper when F_in > H.
        s1 = jnp.dot(x, w1, preferred_element_type=jnp.float32)
        h = jnp.dot(adj, s1.astype(bf16), preferred_element_type=jnp.float32)
    h = jnp.maximum(h + b1_ref[...], 0.0)   # bias + ReLU on the f32 accumulator

    # Dropout between layers: identity in eval mode.

    # --- Layer 2: adj @ (h @ W2) + b2 ---------------------------------------
    s2 = jnp.dot(h.astype(bf16), w2, preferred_element_type=jnp.float32)
    out = jnp.dot(adj, s2.astype(bf16), preferred_element_type=jnp.float32)
    out_ref[0] = (out + b2_ref[...]).astype(out_ref.dtype)


def gcn_dense_forward_batched(x, adj, w1, b1, w2, b2):
    """x: [B, N, F]  adj: [B, N, N]  ->  [B, N, H] (f32)."""
    B, N, F = x.shape
    H = w1.shape[1]
    assert adj.shape == (B, N, N)
    assert w2.shape == (H, H)

    Np = _round_up(N, 8)      # sublane alignment
    Fp = _round_up(F, 128)    # lane-dense contraction dim
    Hp = _round_up(H, 128)    # lane-dense output / hidden dim

    bf16 = jnp.bfloat16
    x_p = _pad_to(x, (B, Np, Fp)).astype(bf16)
    adj_p = _pad_to(adj, (B, Np, Np)).astype(bf16)
    w1_p = _pad_to(w1, (Fp, Hp)).astype(bf16)
    w2_p = _pad_to(w2, (Hp, Hp)).astype(bf16)
    b1_p = _pad_to(b1.reshape(1, H).astype(jnp.float32), (1, Hp))
    b2_p = _pad_to(b2.reshape(1, H).astype(jnp.float32), (1, Hp))

    # Reassociate layer 1 when the input feature width is the smaller side.
    reassociate_l1 = F <= H
    kernel = functools.partial(gcn_dense_kernel, reassociate_l1=reassociate_l1)

    # Advisory cost hint for XLA's scheduler.
    flops = 2 * B * (Np * Np * (Fp if reassociate_l1 else Hp)   # adj contraction, layer 1
                     + Np * Fp * Hp                             # x/ax @ W1
                     + Np * Hp * Hp                             # h @ W2
                     + Np * Np * Hp)                            # adj contraction, layer 2
    bytes_accessed = (x_p.size + adj_p.size + w1_p.size + w2_p.size) * 2 \
        + (b1_p.size + b2_p.size) * 4 + B * Np * Hp * 4

    out = pl.pallas_call(
        kernel,
        out_shape=jax.ShapeDtypeStruct((B, Np, Hp), jnp.float32),
        grid=(B,),
        in_specs=[
            pl.BlockSpec((1, Np, Fp), lambda b: (b, 0, 0)),   # x  (per graph)
            pl.BlockSpec((1, Np, Np), lambda b: (b, 0, 0)),   # adj (per graph)
            pl.BlockSpec((Fp, Hp), lambda b: (0, 0)),         # W1 (shared)
            pl.BlockSpec((1, Hp), lambda b: (0, 0)),          # b1 (shared)
            pl.BlockSpec((Hp, Hp), lambda b: (0, 0)),         # W2 (shared)
            pl.BlockSpec((1, Hp), lambda b: (0, 0)),          # b2 (shared)
        ],
        out_specs=pl.BlockSpec((1, Np, Hp), lambda b: (b, 0, 0)),
        compiler_params=pltpu.CompilerParams(
            dimension_semantics=("parallel",),
        ),
        cost_estimate=pl.CostEstimate(
            flops=flops, transcendentals=0, bytes_accessed=bytes_accessed),
    )(x_p, adj_p, w1_p, b1_p, w2_p, b2_p)

    return out[:, :N, :H]


def gcn_dense_forward(x, adj, w1, b1, w2, b2):
    """Single-graph convenience wrapper: x [N, F], adj [N, N] -> [N, H]."""
    out = gcn_dense_forward_batched(x[None], adj[None], w1, b1, w2, b2)
    return out[0]


def init_gcn_dense_params(key, nfeat, nhid):
    """Matches GraphConvolution_dense.reset_parameters:
    uniform(-stdv, stdv) with stdv = 1/sqrt(out_features)."""
    k1, k2, k3, k4 = jax.random.split(key, 4)
    stdv1 = 1.0 / math.sqrt(nhid)
    stdv2 = 1.0 / math.sqrt(nhid)
    w1 = jax.random.uniform(k1, (nfeat, nhid), jnp.float32, -stdv1, stdv1)
    b1 = jax.random.uniform(k2, (nhid,), jnp.float32, -stdv1, stdv1)
    w2 = jax.random.uniform(k3, (nhid, nhid), jnp.float32, -stdv2, stdv2)
    b2 = jax.random.uniform(k4, (nhid,), jnp.float32, -stdv2, stdv2)
    return w1, b1, w2, b2


def gcn_dense_reference(x, adj, w1, b1, w2, b2):
    """Pure-JAX f32 reference of the PyTorch module forward (eval mode)."""
    h = jnp.maximum(adj @ (x @ w1) + b1, 0.0)
    return adj @ (h @ w2) + b2


if __name__ == "__main__":
    key = jax.random.PRNGKey(0)
    k_param, k_x, k_adj = jax.random.split(key, 3)

    B = 4        # graphs batched over the grid
    N = 8        # number of graph nodes
    NFEAT = 16   # input feature dim
    NHID = 32    # hidden dim

    w1, b1, w2, b2 = init_gcn_dense_params(k_param, NFEAT, NHID)

    x = jax.random.normal(k_x, (B, N, NFEAT), jnp.float32)
    # Symmetric row-normalized-ish dense adjacency with self loops, per graph.
    a = jax.random.uniform(k_adj, (B, N, N), jnp.float32)
    a = (a + jnp.swapaxes(a, -1, -2)) * 0.5 + jnp.eye(N, dtype=jnp.float32)
    adj = a / jnp.sum(a, axis=-1, keepdims=True)

    # Batched path.
    out = gcn_dense_forward_batched(x, adj, w1, b1, w2, b2)
    out = jax.block_until_ready(out)
    ref = jax.vmap(lambda xb, ab: gcn_dense_reference(xb, ab, w1, b1, w2, b2))(x, adj)
    assert out.shape == (B, N, NHID)
    # bf16 matmul operands with f32 accumulation -> loose tolerance vs f32 ref.
    assert jnp.allclose(out, ref, atol=5e-2, rtol=5e-2)

    # Single-graph path.
    out1 = gcn_dense_forward(x[0], adj[0], w1, b1, w2, b2)
    out1 = jax.block_until_ready(out1)
    assert out1.shape == (N, NHID)
    assert jnp.allclose(out1, ref[0], atol=5e-2, rtol=5e-2)

    print("KERNEL_OK")
</pallas_src>

<mosaic_0001>
module attributes {stable_mosaic.version = 11 : i64} {
  func.func @gcn_dense_kernel(%arg0: i32, %arg1: memref<1x8x128xbf16, #tpu.memory_space<vmem>>, %arg2: memref<1x8x8xbf16, #tpu.memory_space<vmem>>, %arg3: memref<128x128xbf16, #tpu.memory_space<vmem>>, %arg4: memref<1x128xf32, #tpu.memory_space<vmem>>, %arg5: memref<128x128xbf16, #tpu.memory_space<vmem>>, %arg6: memref<1x128xf32, #tpu.memory_space<vmem>>, %arg7: memref<1x8x128xf32, #tpu.memory_space<vmem>>) attributes {dimension_semantics = [#tpu.dimension_semantics<parallel>], iteration_bounds = array<i64: 4>, scalar_prefetch = 0 : i64, scratch_operands = 0 : i64, tpu.core_type = #tpu.core_type<tc>, window_params = [{transform_indices = @transform_0, window_bounds = array<i64: 1, 8, 128>}, {transform_indices = @transform_1, window_bounds = array<i64: 1, 8, 8>}, {pipeline_mode = #tpu.pipeline_mode<synchronous>, transform_indices = @transform_2, window_bounds = array<i64: 128, 128>}, {pipeline_mode = #tpu.pipeline_mode<synchronous>, transform_indices = @transform_3, window_bounds = array<i64: 1, 128>}, {pipeline_mode = #tpu.pipeline_mode<synchronous>, transform_indices = @transform_4, window_bounds = array<i64: 128, 128>}, {pipeline_mode = #tpu.pipeline_mode<synchronous>, transform_indices = @transform_5, window_bounds = array<i64: 1, 128>}, {transform_indices = @transform_6, window_bounds = array<i64: 1, 8, 128>}]} {
    %c0 = arith.constant 0 : index
    %c0_0 = arith.constant 0 : index
    %c0_1 = arith.constant 0 : index
    %0 = vector.load %arg1[%c0, %c0_0, %c0_1] : memref<1x8x128xbf16, #tpu.memory_space<vmem>>, vector<1x8x128xbf16>
    %1 = vector.shape_cast %0 : vector<1x8x128xbf16> to vector<8x128xbf16>
    %c0_2 = arith.constant 0 : index
    %c0_3 = arith.constant 0 : index
    %c0_4 = arith.constant 0 : index
    %2 = vector.load %arg2[%c0_2, %c0_3, %c0_4] : memref<1x8x8xbf16, #tpu.memory_space<vmem>>, vector<1x8x8xbf16>
    %3 = vector.shape_cast %2 : vector<1x8x8xbf16> to vector<8x8xbf16>
    %c0_5 = arith.constant 0 : index
    %c0_6 = arith.constant 0 : index
    %4 = vector.load %arg3[%c0_5, %c0_6] : memref<128x128xbf16, #tpu.memory_space<vmem>>, vector<128x128xbf16>
    %c0_7 = arith.constant 0 : index
    %c0_8 = arith.constant 0 : index
    %5 = vector.load %arg5[%c0_7, %c0_8] : memref<128x128xbf16, #tpu.memory_space<vmem>>, vector<128x128xbf16>
    %cst = arith.constant dense<0.000000e+00> : vector<8x128xf32>
    %6 = tpu.matmul %3, %1, %cst {dimension_numbers = #tpu.dot_dimension_numbers<[1], [0], [0], [1], [0, 0, 1, 1], [], []>} : vector<8x8xbf16>, vector<8x128xbf16>, vector<8x128xf32> -> vector<8x128xf32>
    %7 = arith.truncf %6 : vector<8x128xf32> to vector<8x128xbf16>
    %cst_9 = arith.constant dense<0.000000e+00> : vector<8x128xf32>
    %8 = tpu.matmul %7, %4, %cst_9 {dimension_numbers = #tpu.dot_dimension_numbers<[1], [0], [0], [1], [0, 0, 1, 1], [], []>} : vector<8x128xbf16>, vector<128x128xbf16>, vector<8x128xf32> -> vector<8x128xf32>
    %c0_10 = arith.constant 0 : index
    %c0_11 = arith.constant 0 : index
    %9 = vector.load %arg4[%c0_10, %c0_11] : memref<1x128xf32, #tpu.memory_space<vmem>>, vector<1x128xf32>
    %10 = vector.broadcast %9 : vector<1x128xf32> to vector<8x128xf32>
    %11 = arith.addf %8, %10 : vector<8x128xf32>
    %cst_12 = arith.constant 0.000000e+00 : f32
    %12 = vector.broadcast %cst_12 : f32 to vector<8x128xf32>
    %13 = arith.maximumf %11, %12 : vector<8x128xf32>
    %14 = arith.truncf %13 : vector<8x128xf32> to vector<8x128xbf16>
    %cst_13 = arith.constant dense<0.000000e+00> : vector<8x128xf32>
    %15 = tpu.matmul %14, %5, %cst_13 {dimension_numbers = #tpu.dot_dimension_numbers<[1], [0], [0], [1], [0, 0, 1, 1], [], []>} : vector<8x128xbf16>, vector<128x128xbf16>, vector<8x128xf32> -> vector<8x128xf32>
    %16 = arith.truncf %15 : vector<8x128xf32> to vector<8x128xbf16>
    %cst_14 = arith.constant dense<0.000000e+00> : vector<8x128xf32>
    %17 = tpu.matmul %3, %16, %cst_14 {dimension_numbers = #tpu.dot_dimension_numbers<[1], [0], [0], [1], [0, 0, 1, 1], [], []>} : vector<8x8xbf16>, vector<8x128xbf16>, vector<8x128xf32> -> vector<8x128xf32>
    %c0_15 = arith.constant 0 : index
    %c0_16 = arith.constant 0 : index
    %18 = vector.load %arg6[%c0_15, %c0_16] : memref<1x128xf32, #tpu.memory_space<vmem>>, vector<1x128xf32>
    %19 = vector.broadcast %18 : vector<1x128xf32> to vector<8x128xf32>
    %20 = arith.addf %17, %19 : vector<8x128xf32>
    %c0_17 = arith.constant 0 : index
    %c0_18 = arith.constant 0 : index
    %c0_19 = arith.constant 0 : index
    %21 = vector.load %arg7[%c0_17, %c0_18, %c0_19] : memref<1x8x128xf32, #tpu.memory_space<vmem>>, vector<1x8x128xf32>
    %22 = vector.shape_cast %21 : vector<1x8x128xf32> to vector<8x128xf32>
    %23 = vector.shape_cast %20 : vector<8x128xf32> to vector<1x8x128xf32>
    tpu.vector_store %arg7[%c0_17, %c0_18, %c0_19], %23 {strides = array<i32>} : memref<1x8x128xf32, #tpu.memory_space<vmem>>, vector<1x8x128xf32>,
    return
  }
  func.func @transform_0(%arg0: i32) -> (i32, i32, i32) {
    %c0_i32 = arith.constant 0 : i32
    %c0_i32_0 = arith.constant 0 : i32
    %c0_i32_1 = arith.constant 0 : i32
    return %arg0, %c0_i32, %c0_i32_0 : i32, i32, i32
  }
  func.func @transform_1(%arg0: i32) -> (i32, i32, i32) {
    %c0_i32 = arith.constant 0 : i32
    %c0_i32_0 = arith.constant 0 : i32
    %c0_i32_1 = arith.constant 0 : i32
    return %arg0, %c0_i32, %c0_i32_0 : i32, i32, i32
  }
  func.func @transform_2(%arg0: i32) -> (i32, i32) {
    %c0_i32 = arith.constant 0 : i32
    %c0_i32_0 = arith.constant 0 : i32
    %c0_i32_1 = arith.constant 0 : i32
    return %c0_i32, %c0_i32_0 : i32, i32
  }
  func.func @transform_3(%arg0: i32) -> (i32, i32) {
    %c0_i32 = arith.constant 0 : i32
    %c0_i32_0 = arith.constant 0 : i32
    %c0_i32_1 = arith.constant 0 : i32
    return %c0_i32, %c0_i32_0 : i32, i32
  }
  func.func @transform_4(%arg0: i32) -> (i32, i32) {
    %c0_i32 = arith.constant 0 : i32
    %c0_i32_0 = arith.constant 0 : i32
    %c0_i32_1 = arith.constant 0 : i32
    return %c0_i32, %c0_i32_0 : i32, i32
  }
  func.func @transform_5(%arg0: i32) -> (i32, i32) {
    %c0_i32 = arith.constant 0 : i32
    %c0_i32_0 = arith.constant 0 : i32
    %c0_i32_1 = arith.constant 0 : i32
    return %c0_i32, %c0_i32_0 : i32, i32
  }
  func.func @transform_6(%arg0: i32) -> (i32, i32, i32) {
    %c0_i32 = arith.constant 0 : i32
    %c0_i32_0 = arith.constant 0 : i32
    %c0_i32_1 = arith.constant 0 : i32
    return %arg0, %c0_i32, %c0_i32_0 : i32, i32, i32
  }
}

</mosaic_0001>

<llo_original>
// kernel: tpu_custom_call.1
$region0: #{tpu_custom_call.1}
  #allocation0 [shape = 'u32[]', space=smem, size = 0x4, offset = 0x4, fixed_abs, tag = 'smem constant byte address 0x4 - core index']
  #allocation1 [shape = 'u32[144,128]{1,0:T(1,128)}', space=vmem, size = 0x12000, scoped, tag = 'internal scratch']
  %s0 = inlined_call_operand.hbm [shape: bf16[4,8,128], index: 0, kind: input, shape index: {}]
  %s1 = inlined_call_operand.hbm [shape: bf16[4,8,8], index: 1, kind: input, shape index: {}]
  %s2 = inlined_call_operand.hbm [shape: bf16[128,128], index: 2, kind: input, shape index: {}]
  %s3 = inlined_call_operand.vmem [shape: f32[1,128], index: 3, kind: input, shape index: {}]
  %s4 = inlined_call_operand.hbm [shape: bf16[128,128], index: 4, kind: input, shape index: {}]
  %s5 = inlined_call_operand.vmem [shape: f32[1,128], index: 5, kind: input, shape index: {}]
  %s6 = inlined_call_operand.hbm [shape: f32[4,8,128], index: 6, kind: output, shape index: {}]
  %s7 = sld [smem:[#allocation0]]
  $region73: #{tpu_custom_call.1} parent=0
    _
  %s9 = ssub.s32 1, %s7
  %s10 = scalar_select 0, %s9, %s7
  $region1: #{tpu_custom_call.1} parent=0
    #allocation2 [shape = 'u8[4096]{0}', space=vmem, size = 0x1000, scoped, tag = 'input window, operand 0']
    #allocation3 [shape = 's32[2]{0}', space=sflag, size = 0x8, scoped, tag = 'scoped memory for tpu_custom_call.1']
    #allocation4 [shape = 's32[2]{0}', space=sflag, size = 0x8, scoped, tag = 'scoped memory for tpu_custom_call.1']
    #allocation5 [shape = 'u8[4096]{0}', space=vmem, size = 0x1000, scoped, tag = 'input window, operand 1']
    #allocation6 [shape = 's32[2]{0}', space=sflag, size = 0x8, scoped, tag = 'scoped memory for tpu_custom_call.1']
    #allocation7 [shape = 'u8[32768]{0}', space=vmem, size = 0x8000, scoped, tag = 'input window, operand 2, single buffered']
    #allocation8 [shape = 'u8[32768]{0}', space=vmem, size = 0x8000, scoped, tag = 'input window, operand 4, single buffered']
    #allocation9 [shape = 's32[1]{0}', space=sflag, size = 0x4, scoped, tag = 'scoped memory for tpu_custom_call.1']
    #allocation10 [shape = 'u8[8192]{0}', space=vmem, size = 0x2000, scoped, tag = 'output window, operand 0']
    %11 = vsyncpa [#allocation3], 0
    %s12 = scalar_lea.sflag [#allocation3], 1
    %13 = vsyncpa %s12, 0
    %14 = vsyncpa [#allocation6], 0
    %s15 = scalar_lea.sflag [#allocation6], 1
    %16 = vsyncpa %s15, 0
    %17 = vsyncpa [#allocation9], 0
    %18 = vsyncpa [#allocation4], 0
    %s19 = scalar_lea.sflag [#allocation4], 1
    %20 = vsyncpa %s19, 0
    loop: start=0, step=1, limit=6
    $region2: #{tpu_custom_call.1} parent=1 // loop_pre_header
      _
    $region3: #{tpu_custom_call.1} parent=1 // loop_header
      %s22 = sphi 0, %s26
      %p23 = scmp.ge.s32.totalorder %s22, 6
      %s32 = sphi 0, %s34
      %s35 = sphi 0, %s32
      %s36 = sphi 0, %s35
      %s52 = sphi 0, %s36
      %s58 = sphi 0, %s60
      %s61 = sphi 0, %s58
      %s62 = sphi 0, %s61
      %s78 = sphi 0, %s62
      %s82 = sphi 0, %s82
      %s84 = sphi 0, %s82
      %s85 = sphi 0, %s84
      %s99 = sphi 0, %s85
      %s103 = sphi 0, %s103
      %s105 = sphi 0, %s103
      %s106 = sphi 0, %s105
      %s120 = sphi 0, %s106
      %s124 = sphi 0, %s124
      %s126 = sphi 0, %s124
      %s127 = sphi 0, %s126
      %s141 = sphi 0, %s127
      %s145 = sphi 0, %s145
      %s147 = sphi 0, %s145
      %s148 = sphi 0, %s147
      %s162 = sphi 0, %s148
      %s168 = sphi 0, %s170
      %s171 = sphi 0, %s168
      %s172 = sphi 0, %s171
      %s188 = sphi 0, %s172
    $region4: #{tpu_custom_call.1} parent=1 // loop_header_branch
      %25 = sbr.rel (%p23) target = $region8
    $region5: #{tpu_custom_call.1} parent=1 // loop_body
      %s27 = ssub.s32 %s22, 1
      %s28 = ssub.s32 %s22, 2
      %s29 = sadd.s32 %s22, 1
      %s30 = ssub.s32 %s22, %s29
      %p31 = scmp.eq.s32.totalorder %s30, 0
      %s33 = sadd.s32 %s32, 1
      %s34 = scalar_select %p31, %s32, %s33
      %p37 = pneg %p31
      %p38 = scmp.eq.s32.totalorder %s22, 3
      %p39 = por %p37, %p38
      %p40 = scmp.ne.s32.totalorder %s32, %s35
      %p41 = scmp.eq.s32.totalorder %s22, 0
      %p42 = por %p40, %p41
      %p43 = scmp.ne.s32.totalorder %s32, %s35
      %p44 = scmp.eq.s32.totalorder %s27, 3
      %p45 = por %p43, %p44
      %p46 = scmp.ne.s32.totalorder %s35, %s36
      %p47 = scmp.eq.s32.totalorder %s27, 0
      %p48 = por %p46, %p47
      %p49 = scmp.ne.s32.totalorder %s35, %s36
      %p50 = scmp.eq.s32.totalorder %s28, 3
      %p51 = por %p49, %p50
      %p53 = scmp.ne.s32.totalorder %s36, %s52
      %p54 = scmp.eq.s32.totalorder %s28, 0
      %p55 = por %p53, %p54
      %s56 = ssub.s32 %s22, %s29
      %p57 = scmp.eq.s32.totalorder %s56, 0
      %s59 = sadd.s32 %s58, 1
      %s60 = scalar_select %p57, %s58, %s59
      %p63 = pneg %p57
      %p64 = scmp.eq.s32.totalorder %s22, 3
      %p65 = por %p63, %p64
      %p66 = scmp.ne.s32.totalorder %s58, %s61
      %p67 = scmp.eq.s32.totalorder %s22, 0
      %p68 = por %p66, %p67
      %p69 = scmp.ne.s32.totalorder %s58, %s61
      %p70 = scmp.eq.s32.totalorder %s27, 3
      %p71 = por %p69, %p70
      %p72 = scmp.ne.s32.totalorder %s61, %s62
      %p73 = scmp.eq.s32.totalorder %s27, 0
      %p74 = por %p72, %p73
      %p75 = scmp.ne.s32.totalorder %s61, %s62
      %p76 = scmp.eq.s32.totalorder %s28, 3
      %p77 = por %p75, %p76
      %p79 = scmp.ne.s32.totalorder %s62, %s78
      %p80 = scmp.eq.s32.totalorder %s28, 0
      %p81 = por %p79, %p80
      %s83 = sadd.s32 %s82, 1
      %p86 = scmp.eq.s32.totalorder %s22, 3
      %p87 = scmp.ne.s32.totalorder %s82, %s84
      %p88 = scmp.eq.s32.totalorder %s22, 0
      %p89 = por %p87, %p88
      %p90 = scmp.ne.s32.totalorder %s82, %s84
      %p91 = scmp.eq.s32.totalorder %s27, 3
      %p92 = por %p90, %p91
      %p93 = scmp.ne.s32.totalorder %s84, %s85
      %p94 = scmp.eq.s32.totalorder %s27, 0
      %p95 = por %p93, %p94
      %p96 = scmp.ne.s32.totalorder %s84, %s85
      %p97 = scmp.eq.s32.totalorder %s28, 3
      %p98 = por %p96, %p97
      %p100 = scmp.ne.s32.totalorder %s85, %s99
      %p101 = scmp.eq.s32.totalorder %s28, 0
      %p102 = por %p100, %p101
      %s104 = sadd.s32 %s103, 1
      %p107 = scmp.eq.s32.totalorder %s22, 3
      %p108 = scmp.ne.s32.totalorder %s103, %s105
      %p109 = scmp.eq.s32.totalorder %s22, 0
      %p110 = por %p108, %p109
      %p111 = scmp.ne.s32.totalorder %s103, %s105
      %p112 = scmp.eq.s32.totalorder %s27, 3
      %p113 = por %p111, %p112
      %p114 = scmp.ne.s32.totalorder %s105, %s106
      %p115 = scmp.eq.s32.totalorder %s27, 0
      %p116 = por %p114, %p115
      %p117 = scmp.ne.s32.totalorder %s105, %s106
      %p118 = scmp.eq.s32.totalorder %s28, 3
      %p119 = por %p117, %p118
      %p121 = scmp.ne.s32.totalorder %s106, %s120
      %p122 = scmp.eq.s32.totalorder %s28, 0
      %p123 = por %p121, %p122
      %s125 = sadd.s32 %s124, 1
      %p128 = scmp.eq.s32.totalorder %s22, 3
      %p129 = scmp.ne.s32.totalorder %s124, %s126
      %p130 = scmp.eq.s32.totalorder %s22, 0
      %p131 = por %p129, %p130
      %p132 = scmp.ne.s32.totalorder %s124, %s126
      %p133 = scmp.eq.s32.totalorder %s27, 3
      %p134 = por %p132, %p133
      %p135 = scmp.ne.s32.totalorder %s126, %s127
      %p136 = scmp.eq.s32.totalorder %s27, 0
      %p137 = por %p135, %p136
      %p138 = scmp.ne.s32.totalorder %s126, %s127
      %p139 = scmp.eq.s32.totalorder %s28, 3
      %p140 = por %p138, %p139
      %p142 = scmp.ne.s32.totalorder %s127, %s141
      %p143 = scmp.eq.s32.totalorder %s28, 0
      %p144 = por %p142, %p143
      %s146 = sadd.s32 %s145, 1
      %p149 = scmp.eq.s32.totalorder %s22, 3
      %p150 = scmp.ne.s32.totalorder %s145, %s147
      %p151 = scmp.eq.s32.totalorder %s22, 0
      %p152 = por %p150, %p151
      %p153 = scmp.ne.s32.totalorder %s145, %s147
      %p154 = scmp.eq.s32.totalorder %s27, 3
      %p155 = por %p153, %p154
      %p156 = scmp.ne.s32.totalorder %s147, %s148
      %p157 = scmp.eq.s32.totalorder %s27, 0
      %p158 = por %p156, %p157
      %p159 = scmp.ne.s32.totalorder %s147, %s148
      %p160 = scmp.eq.s32.totalorder %s28, 3
      %p161 = por %p159, %p160
      %p163 = scmp.ne.s32.totalorder %s148, %s162
      %p164 = scmp.eq.s32.totalorder %s28, 0
      %p165 = por %p163, %p164
      %s166 = ssub.s32 %s22, %s29
      %p167 = scmp.eq.s32.totalorder %s166, 0
      %s169 = sadd.s32 %s168, 1
      %s170 = scalar_select %p167, %s168, %s169
      %p173 = pneg %p167
      %p174 = scmp.eq.s32.totalorder %s22, 3
      %p175 = por %p173, %p174
      %p176 = scmp.ne.s32.totalorder %s168, %s171
      %p177 = scmp.eq.s32.totalorder %s22, 0
      %p178 = por %p176, %p177
      %p179 = scmp.ne.s32.totalorder %s168, %s171
      %p180 = scmp.eq.s32.totalorder %s27, 3
      %p181 = por %p179, %p180
      %p182 = scmp.ne.s32.totalorder %s171, %s172
      %p183 = scmp.eq.s32.totalorder %s27, 0
      %p184 = por %p182, %p183
      %p185 = scmp.ne.s32.totalorder %s171, %s172
      %p186 = scmp.eq.s32.totalorder %s28, 3
      %p187 = por %p185, %p186
      %p189 = scmp.ne.s32.totalorder %s172, %s188
      %p190 = scmp.eq.s32.totalorder %s28, 0
      %p191 = por %p189, %p190
      %p192 = scmp.le.s32.totalorder 1, %s22
      %p193 = scmp.lt.s32.totalorder %s22, 5
      %p194 = pnand %p192, %p193
      %p195 = pneg %p194
      // Predicated region
      $region9: #{tpu_custom_call.1} parent=5 // pred_check
        _
      $region10: #{tpu_custom_call.1} parent=5 // pred_check_branch
        %197 = sbr.rel (%p194) target = $region12
      $region11: #{tpu_custom_call.1} parent=5 // pred_region
        %s198 = ssub.s32 %s22, 1
        // Predicated region
        $region13: #{tpu_custom_call.1} parent=11 // pred_check
          %p199 = pneg %p95
        $region14: #{tpu_custom_call.1} parent=11 // pred_check_branch
          %201 = sbr.rel (%p199) target = $region16
        $region15: #{tpu_custom_call.1} parent=11 // pred_region
          %s203 = ssub.s32 1024, 1024
          %204 = vsyncadd [#allocation6], %s203
          %s205 = sshll.u32 [#allocation7], 4
          %s206 = int_to_ptr.vmem [resolvable:$true] %s205
          %211 = dma.hbm_to_vmem [thread:$0]  %s2, 1024, %s206, [#allocation6], 64, 64, 4
        $region16: #{tpu_custom_call.1} parent=11 // pred_fallthru
          _
        // Predicated region
        $region17: #{tpu_custom_call.1} parent=11 // pred_check
          %p212 = pneg %p116
        $region18: #{tpu_custom_call.1} parent=11 // pred_check_branch
          %214 = sbr.rel (%p212) target = $region20
        $region19: #{tpu_custom_call.1} parent=11 // pred_region
          _
        $region20: #{tpu_custom_call.1} parent=11 // pred_fallthru
          _
        // Predicated region
        $region21: #{tpu_custom_call.1} parent=11 // pred_check
          %p215 = pneg %p137
        $region22: #{tpu_custom_call.1} parent=11 // pred_check_branch
          %217 = sbr.rel (%p215) target = $region24
        $region23: #{tpu_custom_call.1} parent=11 // pred_region
          %s219 = ssub.s32 1024, 1024
          %220 = vsyncadd [#allocation9], %s219
          %s221 = sshll.u32 [#allocation8], 4
          %s222 = int_to_ptr.vmem [resolvable:$true] %s221
          %227 = dma.hbm_to_vmem [thread:$0]  %s4, 1024, %s222, [#allocation9], 64, 64, 4
        $region24: #{tpu_custom_call.1} parent=11 // pred_fallthru
          _
        // Predicated region
        $region25: #{tpu_custom_call.1} parent=11 // pred_check
          %p228 = pneg %p158
        $region26: #{tpu_custom_call.1} parent=11 // pred_check_branch
          %230 = sbr.rel (%p228) target = $region28
        $region27: #{tpu_custom_call.1} parent=11 // pred_region
          _
        $region28: #{tpu_custom_call.1} parent=11 // pred_fallthru
          _
      $region12: #{tpu_custom_call.1} parent=5 // pred_fallthru
        _
      %p231 = scmp.lt.s32.totalorder %s22, 4
      // Predicated region
      $region29: #{tpu_custom_call.1} parent=5 // pred_check
        %p232 = pneg %p231
      $region30: #{tpu_custom_call.1} parent=5 // pred_check_branch
        %234 = sbr.rel (%p232) target = $region32
      $region31: #{tpu_custom_call.1} parent=5 // pred_region
        // Predicated region
        $region33: #{tpu_custom_call.1} parent=31 // pred_check
          %p235 = pneg %p42
        $region34: #{tpu_custom_call.1} parent=31 // pred_check_branch
          %237 = sbr.rel (%p235) target = $region36
        $region35: #{tpu_custom_call.1} parent=31 // pred_region
          %s238 = sand.u32 %s32, 1
          %s239 = scalar_lea.sflag [#allocation3], %s238
          %s240 = sand.u32 %s32, 1
          %s241 = smul.addr %s240, 4
          %s242 = scalar_lea.vmem [#allocation2], %s241
          %s244 = ssub.s32 64, 64
          %245 = vsyncadd %s239, %s244
          %s246 = smul.addr %s22, 64
          %s247 = scalar_lea.hbm %s0, %s246
          %s249 = sshll.u32 %s242, 4
          %s250 = int_to_ptr.vmem [resolvable:$true] %s249
          %252 = dma.hbm_to_vmem [thread:$0]  %s247, 64, %s250, %s239
        $region36: #{tpu_custom_call.1} parent=31 // pred_fallthru
          _
        // Predicated region
        $region37: #{tpu_custom_call.1} parent=31 // pred_check
          %p253 = pneg %p68
        $region38: #{tpu_custom_call.1} parent=31 // pred_check_branch
          %255 = sbr.rel (%p253) target = $region40
        $region39: #{tpu_custom_call.1} parent=31 // pred_region
          %s256 = sand.u32 %s22, 1
          %s257 = scalar_lea.sflag [#allocation6], %s256
          %s258 = sand.u32 %s58, 1
          %s259 = smul.addr %s258, 4
          %s260 = scalar_lea.vmem [#allocation5], %s259
          %s262 = ssub.s32 64, 64
          %263 = vsyncadd %s257, %s262
          %s264 = smul.addr %s22, 64
          %s265 = scalar_lea.hbm %s1, %s264
          %s267 = sshll.u32 %s260, 4
          %s268 = int_to_ptr.vmem [resolvable:$true] %s267
          %270 = dma.hbm_to_vmem [thread:$0]  %s265, 64, %s268, %s257
        $region40: #{tpu_custom_call.1} parent=31 // pred_fallthru
          _
      $region32: #{tpu_custom_call.1} parent=5 // pred_fallthru
        _
      %p271 = scmp.le.s32.totalorder 1, %s22
      %p272 = scmp.lt.s32.totalorder %s22, 5
      %p273 = pnand %p271, %p272
      %p274 = pneg %p273
      // Predicated region
      $region41: #{tpu_custom_call.1} parent=5 // pred_check
        _
      $region42: #{tpu_custom_call.1} parent=5 // pred_check_branch
        %276 = sbr.rel (%p273) target = $region44
      $region43: #{tpu_custom_call.1} parent=5 // pred_region
        %s277 = ssub.s32 %s22, 1
        %s278 = sand.u32 %s35, 1
        %s279 = scalar_lea.sflag [#allocation3], %s278
        %s280 = sand.u32 %s35, 1
        %s281 = smul.addr %s280, 4
        %s282 = scalar_lea.vmem [#allocation2], %s281
        // Predicated region
        $region45: #{tpu_custom_call.1} parent=43 // pred_check
          %p283 = pneg %p48
        $region46: #{tpu_custom_call.1} parent=43 // pred_check_branch
          %285 = sbr.rel (%p283) target = $region48
        $region47: #{tpu_custom_call.1} parent=43 // pred_region
          %286 = dma.done %s279, 64
        $region48: #{tpu_custom_call.1} parent=43 // pred_fallthru
          _
        %s287 = sand.u32 %s27, 1
        %s288 = scalar_lea.sflag [#allocation6], %s287
        %s289 = sand.u32 %s61, 1
        %s290 = smul.addr %s289, 4
        %s291 = scalar_lea.vmem [#allocation5], %s290
        // Predicated region
        $region49: #{tpu_custom_call.1} parent=43 // pred_check
          %p292 = pneg %p74
        $region50: #{tpu_custom_call.1} parent=43 // pred_check_branch
          %294 = sbr.rel (%p292) target = $region52
        $region51: #{tpu_custom_call.1} parent=43 // pred_region
          %295 = dma.done %s288, 64
        $region52: #{tpu_custom_call.1} parent=43 // pred_fallthru
          _
        // Predicated region
        $region53: #{tpu_custom_call.1} parent=43 // pred_check
          %p296 = pneg %p95
        $region54: #{tpu_custom_call.1} parent=43 // pred_check_branch
          %298 = sbr.rel (%p296) target = $region56
        $region55: #{tpu_custom_call.1} parent=43 // pred_region
          %299 = dma.done [#allocation6], 1024
        $region56: #{tpu_custom_call.1} parent=43 // pred_fallthru
          _
        // Predicated region
        $region57: #{tpu_custom_call.1} parent=43 // pred_check
          %p300 = pneg %p137
        $region58: #{tpu_custom_call.1} parent=43 // pred_check_branch
          %302 = sbr.rel (%p300) target = $region60
        $region59: #{tpu_custom_call.1} parent=43 // pred_region
          %303 = dma.done [#allocation9], 1024
        $region60: #{tpu_custom_call.1} parent=43 // pred_fallthru
          _
        %s304 = sand.u32 %s35, 1
        %s305 = scalar_lea.sflag [#allocation3], %s304
        %s306 = sand.u32 %s35, 1
        %s307 = smul.addr %s306, 4
        %s308 = scalar_lea.vmem [#allocation2], %s307
        %p309 = pneg %p48
        %p310 = pneg %p45
        %s311 = sand.u32 %s27, 1
        %s312 = scalar_lea.sflag [#allocation6], %s311
        %s313 = sand.u32 %s61, 1
        %s314 = smul.addr %s313, 4
        %s315 = scalar_lea.vmem [#allocation5], %s314
        %p316 = pneg %p74
        %p317 = pneg %p71
        %p318 = pneg %p95
        %p319 = pneg %p92
        %p320 = pneg %p116
        %p321 = pneg %p113
        %p322 = pneg %p137
        %p323 = pneg %p134
        %p324 = pneg %p158
        %p325 = pneg %p155
        %p326 = pneg %p184
        %p327 = pneg %p181
        %s328 = sand.u32 %s171, 1
        %s329 = scalar_lea.sflag [#allocation4], %s328
        %s330 = sand.u32 %s171, 1
        %s331 = smul.addr %s330, 8
        %s332 = scalar_lea.vmem [#allocation10], %s331
        %v334 = vld [vmem:[%s282] sm:$0xf]
        %v335 = vld [vmem:[%s291] sm:$0xf]
        %v336 = vld [vmem:[#allocation7] sm:$0xf]
        %v337 = vld [vmem:[#allocation7 + $0x4] sm:$0xf]
        %v338 = vld [vmem:[#allocation7 + $0x8] sm:$0xf]
        %v339 = vld [vmem:[#allocation7 + $0xc] sm:$0xf]
        %v340 = vld [vmem:[#allocation7 + $0x10] sm:$0xf]
        %v341 = vld [vmem:[#allocation7 + $0x14] sm:$0xf]
        %v342 = vld [vmem:[#allocation7 + $0x18] sm:$0xf]
        %v343 = vld [vmem:[#allocation7 + $0x1c] sm:$0xf]
        %v344 = vld [vmem:[#allocation7 + $0x20] sm:$0xf]
        %v345 = vld [vmem:[#allocation7 + $0x24] sm:$0xf]
        %v346 = vld [vmem:[#allocation7 + $0x28] sm:$0xf]
        %v347 = vld [vmem:[#allocation7 + $0x2c] sm:$0xf]
        %v348 = vld [vmem:[#allocation7 + $0x30] sm:$0xf]
        %v349 = vld [vmem:[#allocation7 + $0x34] sm:$0xf]
        %v350 = vld [vmem:[#allocation7 + $0x38] sm:$0xf]
        %v351 = vld [vmem:[#allocation7 + $0x3c] sm:$0xf]
        %v352 = vld [vmem:[#allocation8] sm:$0xf]
        %v353 = vld [vmem:[#allocation8 + $0x4] sm:$0xf]
        %v354 = vld [vmem:[#allocation8 + $0x8] sm:$0xf]
        %v355 = vld [vmem:[#allocation8 + $0xc] sm:$0xf]
        %v356 = vld [vmem:[#allocation8 + $0x10] sm:$0xf]
        %v357 = vld [vmem:[#allocation8 + $0x14] sm:$0xf]
        %v358 = vld [vmem:[#allocation8 + $0x18] sm:$0xf]
        %v359 = vld [vmem:[#allocation8 + $0x1c] sm:$0xf]
        %v360 = vld [vmem:[#allocation8 + $0x20] sm:$0xf]
        %v361 = vld [vmem:[#allocation8 + $0x24] sm:$0xf]
        %v362 = vld [vmem:[#allocation8 + $0x28] sm:$0xf]
        %v363 = vld [vmem:[#allocation8 + $0x2c] sm:$0xf]
        %v364 = vld [vmem:[#allocation8 + $0x30] sm:$0xf]
        %v365 = vld [vmem:[#allocation8 + $0x34] sm:$0xf]
        %v366 = vld [vmem:[#allocation8 + $0x38] sm:$0xf]
        %v367 = vld [vmem:[#allocation8 + $0x3c] sm:$0xf]
        %vm368 = vcmask 64512
        %v370 = vsel %vm368, %v335, 0
        %vm372 = vcmask 1043456
        %v374 = vsel %vm372, %v334, 0
        %376 = vmatprep.subr.bf16.mxu0 0
        %377 = vmatpush1.bf16.msra.mxu0 %v374
        %378 = vmatprep.subr.bf16.mxu0 0
        %379 = vmatpush1.bf16.msra.mxu0 0
        %380 = vmatprep.subr.bf16.mxu0 0
        %381 = vmatpush1.bf16.msra.mxu0 0
        %382 = vmatprep.subr.bf16.mxu0 0
        %383 = vmatpush1.bf16.msra.mxu0 0
        %384 = vmatprep.subr.bf16.mxu0 0
        %385 = vmatpush1.bf16.msra.mxu0 0
        %386 = vmatprep.subr.bf16.mxu0 0
        %387 = vmatpush1.bf16.msra.mxu0 0
        %388 = vmatprep.subr.bf16.mxu0 0
        %389 = vmatpush1.bf16.msra.mxu0 0
        %390 = vmatprep.subr.bf16.mxu0 0
        %391 = vmatpush1.bf16.msra.mxu0 0
        %392 = vmatprep.subr.bf16.mxu0 0
        %393 = vmatpush1.bf16.msra.mxu0 0
        %394 = vmatprep.subr.bf16.mxu0 0
        %395 = vmatpush1.bf16.msra.mxu0 0
        %396 = vmatprep.subr.bf16.mxu0 0
        %397 = vmatpush1.bf16.msra.mxu0 0
        %398 = vmatprep.subr.bf16.mxu0 0
        %399 = vmatpush1.bf16.msra.mxu0 0
        %400 = vmatprep.subr.bf16.mxu0 0
        %401 = vmatpush1.bf16.msra.mxu0 0
        %402 = vmatprep.subr.bf16.mxu0 0
        %403 = vmatpush1.bf16.msra.mxu0 0
        %404 = vmatprep.subr.bf16.mxu0 0
        %405 = vmatpush1.bf16.msra.mxu0 0
        %406 = vmatprep.subr.bf16.mxu0 0
        %407 = vmatpush1.bf16.msra.mxu0 0
        %408 = vmatprep.mubr.bf16.mxu0 0
        %409 = vmatmul.mubr.bf16.gmra.mrb[0].mxu0 %v370
        %v410 = vpop.f32.mrb[0].mxu0
        %v411 = vadd.f32 0.0, %v410
        %v412 = vpop.f32.mrb[0].mxu0
        %v413 = vpop.f32.mrb[0].mxu0
        %v414 = vpop.f32.mrb[0].mxu0
        %415 = vdwg.mxu0
        %v416 = vpack.c.bf16 %v411, %v411
        %v417 = vld [vmem:[%s3] sm:$0x1]
        %v419 = vlaneseq
        %v420 = vshrl.u32 %v419, 7
        %v421 = vsub.s32 0, %v420
        %v422 = vrot.slane %v417, %v421
        %v440 = vunpack.c.l.b16 %v336
        %v441 = vunpack.c.l.b16 %v337
        %v442 = vunpack.c.l.b16 %v338
        %v443 = vunpack.c.l.b16 %v339
        %v444 = vunpack.c.l.b16 %v340
        %v445 = vunpack.c.l.b16 %v341
        %v446 = vunpack.c.l.b16 %v342
        %v447 = vunpack.c.l.b16 %v343
        %v448 = vunpack.c.l.b16 %v344
        %v449 = vunpack.c.l.b16 %v345
        %v450 = vunpack.c.l.b16 %v346
        %v451 = vunpack.c.l.b16 %v347
        %v452 = vunpack.c.l.b16 %v348
        %v453 = vunpack.c.l.b16 %v349
        %v454 = vunpack.c.l.b16 %v350
        %v455 = vunpack.c.l.b16 %v351
        %v456 = vpack.c.b16 %v441, %v440
        %v457 = vpack.c.b16 %v443, %v442
        %v458 = vpack.c.b16 %v445, %v444
        %v459 = vpack.c.b16 %v447, %v446
        %v460 = vpack.c.b16 %v449, %v448
        %v461 = vpack.c.b16 %v451, %v450
        %v462 = vpack.c.b16 %v453, %v452
        %v463 = vpack.c.b16 %v455, %v454
        %472 = vmatprep.subr.bf16.mxu0 0
        %473 = vmatpush1.bf16.msra.mxu0 %v456
        %474 = vmatprep.subr.bf16.mxu0 0
        %475 = vmatpush1.bf16.msra.mxu0 %v457
        %476 = vmatprep.subr.bf16.mxu0 0
        %477 = vmatpush1.bf16.msra.mxu0 %v458
        %478 = vmatprep.subr.bf16.mxu0 0
        %479 = vmatpush1.bf16.msra.mxu0 %v459
        %480 = vmatprep.subr.bf16.mxu0 0
        %481 = vmatpush1.bf16.msra.mxu0 %v460
        %482 = vmatprep.subr.bf16.mxu0 0
        %483 = vmatpush1.bf16.msra.mxu0 %v461
        %484 = vmatprep.subr.bf16.mxu0 0
        %485 = vmatpush1.bf16.msra.mxu0 %v462
        %486 = vmatprep.subr.bf16.mxu0 0
        %487 = vmatpush1.bf16.msra.mxu0 %v463
        %488 = vmatprep.subr.bf16.mxu0 0
        %489 = vmatpush1.bf16.msra.mxu0 0
        %490 = vmatprep.subr.bf16.mxu0 0
        %491 = vmatpush1.bf16.msra.mxu0 0
        %492 = vmatprep.subr.bf16.mxu0 0
        %493 = vmatpush1.bf16.msra.mxu0 0
        %494 = vmatprep.subr.bf16.mxu0 0
        %495 = vmatpush1.bf16.msra.mxu0 0
        %496 = vmatprep.subr.bf16.mxu0 0
        %497 = vmatpush1.bf16.msra.mxu0 0
        %498 = vmatprep.subr.bf16.mxu0 0
        %499 = vmatpush1.bf16.msra.mxu0 0
        %500 = vmatprep.subr.bf16.mxu0 0
        %501 = vmatpush1.bf16.msra.mxu0 0
        %502 = vmatprep.subr.bf16.mxu0 0
        %503 = vmatpush1.bf16.msra.mxu0 0
        %504 = vmatprep.mubr.bf16.mxu0 0
        %505 = vmatmul.mubr.bf16.gmra.mrb[0].mxu0 %v416
        %v506 = vpop.f32.mrb[0].mxu0
        %v507 = vadd.f32 %v422, %v506
        %v508 = vpop.f32.mrb[0].mxu0
        %v509 = vpop.f32.mrb[0].mxu0
        %v510 = vpop.f32.mrb[0].mxu0
        %511 = vdwg.mxu0
        %v512 = vmax.f32 %v507, 0.0
        %v513 = vpack.c.bf16 %v512, %v512
        %v530 = vunpack.c.l.b16 %v352
        %v531 = vunpack.c.l.b16 %v353
        %v532 = vunpack.c.l.b16 %v354
        %v533 = vunpack.c.l.b16 %v355
        %v534 = vunpack.c.l.b16 %v356
        %v535 = vunpack.c.l.b16 %v357
        %v536 = vunpack.c.l.b16 %v358
        %v537 = vunpack.c.l.b16 %v359
        %v538 = vunpack.c.l.b16 %v360
        %v539 = vunpack.c.l.b16 %v361
        %v540 = vunpack.c.l.b16 %v362
        %v541 = vunpack.c.l.b16 %v363
        %v542 = vunpack.c.l.b16 %v364
        %v543 = vunpack.c.l.b16 %v365
        %v544 = vunpack.c.l.b16 %v366
        %v545 = vunpack.c.l.b16 %v367
        %v546 = vpack.c.b16 %v531, %v530
        %v547 = vpack.c.b16 %v533, %v532
        %v548 = vpack.c.b16 %v535, %v534
        %v549 = vpack.c.b16 %v537, %v536
        %v550 = vpack.c.b16 %v539, %v538
        %v551 = vpack.c.b16 %v541, %v540
        %v552 = vpack.c.b16 %v543, %v542
        %v553 = vpack.c.b16 %v545, %v544
        %562 = vmatprep.subr.bf16.mxu0 0
        %563 = vmatpush1.bf16.msra.mxu0 %v546
        %564 = vmatprep.subr.bf16.mxu0 0
        %565 = vmatpush1.bf16.msra.mxu0 %v547
        %566 = vmatprep.subr.bf16.mxu0 0
        %567 = vmatpush1.bf16.msra.mxu0 %v548
        %568 = vmatprep.subr.bf16.mxu0 0
        %569 = vmatpush1.bf16.msra.mxu0 %v549
        %570 = vmatprep.subr.bf16.mxu0 0
        %571 = vmatpush1.bf16.msra.mxu0 %v550
        %572 = vmatprep.subr.bf16.mxu0 0
        %573 = vmatpush1.bf16.msra.mxu0 %v551
        %574 = vmatprep.subr.bf16.mxu0 0
        %575 = vmatpush1.bf16.msra.mxu0 %v552
        %576 = vmatprep.subr.bf16.mxu0 0
        %577 = vmatpush1.bf16.msra.mxu0 %v553
        %578 = vmatprep.subr.bf16.mxu0 0
        %579 = vmatpush1.bf16.msra.mxu0 0
        %580 = vmatprep.subr.bf16.mxu0 0
        %581 = vmatpush1.bf16.msra.mxu0 0
        %582 = vmatprep.subr.bf16.mxu0 0
        %583 = vmatpush1.bf16.msra.mxu0 0
        %584 = vmatprep.subr.bf16.mxu0 0
        %585 = vmatpush1.bf16.msra.mxu0 0
        %586 = vmatprep.subr.bf16.mxu0 0
        %587 = vmatpush1.bf16.msra.mxu0 0
        %588 = vmatprep.subr.bf16.mxu0 0
        %589 = vmatpush1.bf16.msra.mxu0 0
        %590 = vmatprep.subr.bf16.mxu0 0
        %591 = vmatpush1.bf16.msra.mxu0 0
        %592 = vmatprep.subr.bf16.mxu0 0
        %593 = vmatpush1.bf16.msra.mxu0 0
        %594 = vmatprep.mubr.bf16.mxu0 0
        %595 = vmatmul.mubr.bf16.gmra.mrb[0].mxu0 %v513
        %v596 = vpop.f32.mrb[0].mxu0
        %v597 = vadd.f32 0.0, %v596
        %v598 = vpop.f32.mrb[0].mxu0
        %v599 = vpop.f32.mrb[0].mxu0
        %v600 = vpop.f32.mrb[0].mxu0
        %601 = vdwg.mxu0
        %v602 = vpack.c.bf16 %v597, %v597
        %v603 = vld [vmem:[%s5] sm:$0x1]
        %v605 = vlaneseq
        %v606 = vshrl.u32 %v605, 7
        %v607 = vsub.s32 0, %v606
        %v608 = vrot.slane %v603, %v607
        %v611 = vsel %vm372, %v602, 0
        %613 = vmatprep.subr.bf16.mxu0 0
        %614 = vmatpush1.bf16.msra.mxu0 %v611
        %615 = vmatprep.subr.bf16.mxu0 0
        %616 = vmatpush1.bf16.msra.mxu0 0
        %617 = vmatprep.subr.bf16.mxu0 0
        %618 = vmatpush1.bf16.msra.mxu0 0
        %619 = vmatprep.subr.bf16.mxu0 0
        %620 = vmatpush1.bf16.msra.mxu0 0
        %621 = vmatprep.subr.bf16.mxu0 0
        %622 = vmatpush1.bf16.msra.mxu0 0
        %623 = vmatprep.subr.bf16.mxu0 0
        %624 = vmatpush1.bf16.msra.mxu0 0
        %625 = vmatprep.subr.bf16.mxu0 0
        %626 = vmatpush1.bf16.msra.mxu0 0
        %627 = vmatprep.subr.bf16.mxu0 0
        %628 = vmatpush1.bf16.msra.mxu0 0
        %629 = vmatprep.subr.bf16.mxu0 0
        %630 = vmatpush1.bf16.msra.mxu0 0
        %631 = vmatprep.subr.bf16.mxu0 0
        %632 = vmatpush1.bf16.msra.mxu0 0
        %633 = vmatprep.subr.bf16.mxu0 0
        %634 = vmatpush1.bf16.msra.mxu0 0
        %635 = vmatprep.subr.bf16.mxu0 0
        %636 = vmatpush1.bf16.msra.mxu0 0
        %637 = vmatprep.subr.bf16.mxu0 0
        %638 = vmatpush1.bf16.msra.mxu0 0
        %639 = vmatprep.subr.bf16.mxu0 0
        %640 = vmatpush1.bf16.msra.mxu0 0
        %641 = vmatprep.subr.bf16.mxu0 0
        %642 = vmatpush1.bf16.msra.mxu0 0
        %643 = vmatprep.subr.bf16.mxu0 0
        %644 = vmatpush1.bf16.msra.mxu0 0
        %645 = vmatprep.mubr.bf16.mxu0 0
        %646 = vmatmul.mubr.bf16.gmra.mrb[0].mxu0 %v370
        %v647 = vpop.f32.mrb[0].mxu0
        %v648 = vadd.f32 %v608, %v647
        %v649 = vpop.f32.mrb[0].mxu0
        %v650 = vpop.f32.mrb[0].mxu0
        %v651 = vpop.f32.mrb[0].mxu0
        %652 = vdwg.mxu0
        %653 = vst [vmem:[%s332] sm:$0xff] %v648
        %s654 = sand.u32 %s171, 1
        %s655 = scalar_lea.sflag [#allocation4], %s654
        %s656 = sand.u32 %s171, 1
        %s657 = smul.addr %s656, 8
        %s658 = scalar_lea.vmem [#allocation10], %s657
        // Predicated region
        $region61: #{tpu_custom_call.1} parent=43 // pred_check
          %p659 = pneg %p181
        $region62: #{tpu_custom_call.1} parent=43 // pred_check_branch
          %661 = sbr.rel (%p659) target = $region64
        $region63: #{tpu_custom_call.1} parent=43 // pred_region
          %s663 = ssub.s32 128, 128
          %664 = vsyncadd %s655, %s663
          %s665 = smul.addr %s27, 128
          %s666 = scalar_lea.hbm %s6, %s665
          %s668 = sshll.u32 %s658, 4
          %s669 = int_to_ptr.vmem [resolvable:$true] %s668
          %671 = dma.vmem_to_hbm [thread:$0]  %s669, 128, %s666, %s655
        $region64: #{tpu_custom_call.1} parent=43 // pred_fallthru
          _
      $region44: #{tpu_custom_call.1} parent=5 // pred_fallthru
        _
      %p672 = scmp.le.s32.totalorder 2, %s22
      // Predicated region
      $region65: #{tpu_custom_call.1} parent=5 // pred_check
        %p673 = pneg %p672
      $region66: #{tpu_custom_call.1} parent=5 // pred_check_branch
        %675 = sbr.rel (%p673) target = $region68
      $region67: #{tpu_custom_call.1} parent=5 // pred_region
        %s676 = ssub.s32 %s22, 2
        // Predicated region
        $region69: #{tpu_custom_call.1} parent=67 // pred_check
          %p677 = pneg %p187
        $region70: #{tpu_custom_call.1} parent=67 // pred_check_branch
          %679 = sbr.rel (%p677) target = $region72
        $region71: #{tpu_custom_call.1} parent=67 // pred_region
          %s680 = sand.u32 %s172, 1
          %s681 = scalar_lea.sflag [#allocation4], %s680
          %s682 = sand.u32 %s172, 1
          %s683 = smul.addr %s682, 8
          %s684 = scalar_lea.vmem [#allocation10], %s683
          %685 = dma.done %s681, 128
        $region72: #{tpu_custom_call.1} parent=67 // pred_fallthru
          _
      $region68: #{tpu_custom_call.1} parent=5 // pred_fallthru
        _
    $region6: #{tpu_custom_call.1} parent=1 // loop_footer
      %s26 = sadd.s32 1, %s22
    $region7: #{tpu_custom_call.1} parent=1 // loop_footer_branch
      %21 = sbr.rel target = $region3
    $region8: #{tpu_custom_call.1} parent=1 // loop_exit
      _
    %686 = vsyncpa [#allocation3], 1
    %s687 = scalar_lea.sflag [#allocation3], 1
    %688 = vsyncpa %s687, 1
    %689 = vsyncpa [#allocation6], 1
    %s690 = scalar_lea.sflag [#allocation6], 1
    %691 = vsyncpa %s690, 1
    %692 = vsyncpa [#allocation9], 1
    %693 = vsyncpa [#allocation4], 1
    %s694 = scalar_lea.sflag [#allocation4], 1
    %695 = vsyncpa %s694, 1

</llo_original>
